<compile_context>
chip_gen: v7x
topology: tpu7x:2x2x1
jax: 0.10.0
libtpu: 0.0.40
codegen_flags: <defaults>
</compile_context>

<pallas_src>
from functools import lru_cache, partial

import numpy as np
import jax
import jax.numpy as jnp
from jax.experimental import pallas as pl
from jax.experimental.pallas import tpu as pltpu


@lru_cache(maxsize=None)
def _scaled_neighbor_matrix_np(num_s: int) -> np.ndarray:
    """A_scaled (N, N) with  y[p] = (A_scaled @ x)[p]  where
    A[p, :] gathers sum_n (x[n] - x[p]) over the 4 'neighbors'
    (i+1, j+1), (i+1, j-2), (i-2, j+1), (i-2, j-2) (mod num_s), and the
    sequential whole-tensor /= 8 is folded in as row scale 8**-(N - p)."""
    N = num_s * num_s
    A = np.zeros((N, N), dtype=np.float64)
    for i in range(num_s):
        for j in range(num_s):
            p = i * num_s + j
            for kk in (-1, 2):
                for ll in (-1, 2):
                    ni = (i - kk) % num_s
                    nj = (j - ll) % num_s
                    A[p, ni * num_s + nj] += 1.0
                    A[p, p] -= 1.0
    scale = np.array([8.0 ** -(N - p) for p in range(N)], dtype=np.float64)
    return (A * scale[:, None]).astype(np.float32)


@lru_cache(maxsize=None)
def _scaled_neighbor_matrix_device(num_s: int, dtype):
    # Cached per (num_s, dtype): builds + transfers the constant once.
    return jnp.asarray(_scaled_neighbor_matrix_np(num_s), dtype=dtype)


def _pick_tile_b(b: int, k: int, c: int, itemsize: int) -> int:
    """Largest divisor of b such that the per-step in+out tile traffic
    (3 * TB * K * C * itemsize) stays around ~6 MiB, capped so the grid keeps
    at least 2 steps when b >= 2 (megacore)."""
    row_bytes = 3 * k * c * itemsize          # (K, C) input + (K, 2C) output
    budget = 6 * 1024 * 1024
    max_tb = max(1, budget // max(1, row_bytes))
    if b >= 2:
        max_tb = min(max_tb, (b + 1) // 2)
    max_tb = min(max_tb, b)
    tb = 1
    for d in range(1, int(max_tb) + 1):
        if b % d == 0:
            tb = d
    return tb


def _neighbor_agg_kernel(x_ref, a_ref, out_ref, *, c: int):
    # x_ref: (TB, K, C)   a_ref: (K, K) pre-scaled   out_ref: (TB, K, 2C)
    a = a_ref[...]                       # hoisted once; resident constant block
    tb = x_ref.shape[0]
    for bi in range(tb):                 # TB is small & static -> unrolled
        xb = x_ref[bi]                                               # (K, C)
        yb = jnp.dot(a, xb, preferred_element_type=jnp.float32)      # MXU
        out_ref[bi, :, :c] = xb                                      # passthrough half
        out_ref[bi, :, c:] = yb.astype(out_ref.dtype)                # aggregated half


def neighbor_aggregation(x):
    b, k, c = x.shape
    num_s = int(round(np.sqrt(k)))
    assert num_s * num_s == k, "k must be a perfect square"

    a_dtype = jnp.bfloat16 if x.dtype == jnp.bfloat16 else jnp.float32
    A = _scaled_neighbor_matrix_device(num_s, a_dtype)

    tb = _pick_tile_b(b, k, c, np.dtype(x.dtype).itemsize)
    grid = (b // tb,)

    return pl.pallas_call(
        partial(_neighbor_agg_kernel, c=c),
        out_shape=jax.ShapeDtypeStruct((b, k, 2 * c), x.dtype),
        grid_spec=pltpu.PrefetchScalarGridSpec(
            num_scalar_prefetch=0,
            grid=grid,
            in_specs=[
                pl.BlockSpec((tb, k, c), lambda bi: (bi, 0, 0)),
                pl.BlockSpec((k, k), lambda bi: (0, 0)),   # constant, stays resident
            ],
            out_specs=pl.BlockSpec((tb, k, 2 * c), lambda bi: (bi, 0, 0)),
        ),
        compiler_params=pltpu.CompilerParams(
            dimension_semantics=("parallel",),
            vmem_limit_bytes=32 * 1024 * 1024,
        ),
    )(x, A)


def _reference(x):
    """Pure-JAX transliteration of the PyTorch forward (for verification)."""
    b, k, c = x.shape
    num_s = int(round(np.sqrt(k)))
    x2d = jnp.transpose(x, (0, 2, 1)).reshape(b, c, num_s, num_s)
    y = jnp.zeros_like(x2d)
    for i in range(num_s):
        for j in range(num_s):
            acc = jnp.zeros((b, c), dtype=x.dtype)
            for kk in (-1, 2):
                for ll in (-1, 2):
                    acc = acc + x2d[:, :, (i - kk) % num_s, (j - ll) % num_s] - x2d[:, :, i, j]
            y = y.at[:, :, i, j].add(acc)
            y = y / 8
    y = jnp.transpose(y.reshape(b, c, -1), (0, 2, 1))
    return jnp.concatenate((x, y), axis=2)


if __name__ == "__main__":
    key = jax.random.PRNGKey(0)
    b, k, c = 2, 16, 4          # k = 16 -> num_s = 4 spatial grid
    x = jax.random.normal(key, (b, k, c), dtype=jnp.float32)

    out = neighbor_aggregation(x)
    jax.block_until_ready(out)

    ref = _reference(x)
    np.testing.assert_allclose(np.asarray(out), np.asarray(ref), rtol=1e-4, atol=1e-20)
    assert out.shape == (b, k, 2 * c)
    print("KERNEL_OK")
</pallas_src>

<mosaic_0001>
module attributes {stable_mosaic.version = 11 : i64} {
  func.func @_neighbor_agg_kernel(%arg0: i32, %arg1: memref<1x16x4xf32, #tpu.memory_space<vmem>>, %arg2: memref<16x16xf32, #tpu.memory_space<vmem>>, %arg3: memref<1x16x8xf32, #tpu.memory_space<vmem>>) attributes {dimension_semantics = [#tpu.dimension_semantics<parallel>], iteration_bounds = array<i64: 2>, scalar_prefetch = 0 : i64, scratch_operands = 0 : i64, tpu.core_type = #tpu.core_type<tc>, window_params = [{transform_indices = @transform_0, window_bounds = array<i64: 1, 16, 4>}, {pipeline_mode = #tpu.pipeline_mode<synchronous>, transform_indices = @transform_1, window_bounds = array<i64: 16, 16>}, {transform_indices = @transform_2, window_bounds = array<i64: 1, 16, 8>}]} {
    %c0 = arith.constant 0 : index
    %c0_0 = arith.constant 0 : index
    %0 = vector.load %arg2[%c0, %c0_0] : memref<16x16xf32, #tpu.memory_space<vmem>>, vector<16x16xf32>
    %c0_1 = arith.constant 0 : index
    %c0_2 = arith.constant 0 : index
    %c0_3 = arith.constant 0 : index
    %1 = vector.load %arg1[%c0_1, %c0_2, %c0_3] : memref<1x16x4xf32, #tpu.memory_space<vmem>>, vector<1x16x4xf32>
    %2 = vector.shape_cast %1 : vector<1x16x4xf32> to vector<16x4xf32>
    %cst = arith.constant dense<0.000000e+00> : vector<16x4xf32>
    %3 = tpu.matmul %0, %2, %cst {dimension_numbers = #tpu.dot_dimension_numbers<[1], [0], [0], [1], [0, 0, 1, 1], [], []>} : vector<16x16xf32>, vector<16x4xf32>, vector<16x4xf32> -> vector<16x4xf32>
    %c0_4 = arith.constant 0 : index
    %c0_5 = arith.constant 0 : index
    %c0_6 = arith.constant 0 : index
    %4 = vector.load %arg3[%c0_4, %c0_5, %c0_6] : memref<1x16x8xf32, #tpu.memory_space<vmem>>, vector<1x16x4xf32>
    %5 = vector.shape_cast %4 : vector<1x16x4xf32> to vector<16x4xf32>
    %6 = vector.shape_cast %2 : vector<16x4xf32> to vector<1x16x4xf32>
    tpu.vector_store %arg3[%c0_4, %c0_5, %c0_6], %6 {strides = array<i32>} : memref<1x16x8xf32, #tpu.memory_space<vmem>>, vector<1x16x4xf32>,
    %c0_7 = arith.constant 0 : index
    %c0_8 = arith.constant 0 : index
    %c4 = arith.constant 4 : index
    %7 = vector.load %arg3[%c0_7, %c0_8, %c4] : memref<1x16x8xf32, #tpu.memory_space<vmem>>, vector<1x16x4xf32>
    %8 = vector.shape_cast %7 : vector<1x16x4xf32> to vector<16x4xf32>
    %9 = vector.shape_cast %3 : vector<16x4xf32> to vector<1x16x4xf32>
    tpu.vector_store %arg3[%c0_7, %c0_8, %c4], %9 {strides = array<i32>} : memref<1x16x8xf32, #tpu.memory_space<vmem>>, vector<1x16x4xf32>,
    return
  }
  func.func @transform_0(%arg0: i32) -> (i32, i32, i32) {
    %c0_i32 = arith.constant 0 : i32
    %c0_i32_0 = arith.constant 0 : i32
    %c0_i32_1 = arith.constant 0 : i32
    return %arg0, %c0_i32, %c0_i32_0 : i32, i32, i32
  }
  func.func @transform_1(%arg0: i32) -> (i32, i32) {
    %c0_i32 = arith.constant 0 : i32
    %c0_i32_0 = arith.constant 0 : i32
    %c0_i32_1 = arith.constant 0 : i32
    return %c0_i32, %c0_i32_0 : i32, i32
  }
  func.func @transform_2(%arg0: i32) -> (i32, i32, i32) {
    %c0_i32 = arith.constant 0 : i32
    %c0_i32_0 = arith.constant 0 : i32
    %c0_i32_1 = arith.constant 0 : i32
    return %arg0, %c0_i32, %c0_i32_0 : i32, i32, i32
  }
}

</mosaic_0001>

<llo_original>
// kernel: tpu_custom_call.1
$region0: #{tpu_custom_call.1}
  #allocation0 [shape = 'u32[]', space=smem, size = 0x4, offset = 0x4, fixed_abs, tag = 'smem constant byte address 0x4 - core index']
  #allocation1 [shape = 'u32[144,128]{1,0:T(1,128)}', space=vmem, size = 0x12000, scoped, tag = 'internal scratch']
  %s0 = inlined_call_operand.vmem [shape: f32[2,16,4], index: 0, kind: input, shape index: {}]
  %s1 = inlined_call_operand.vmem [shape: f32[16,16], index: 1, kind: input, shape index: {}]
  %s2 = inlined_call_operand.vmem [shape: f32[2,16,8], index: 2, kind: output, shape index: {}]
  %s3 = sld [smem:[#allocation0]]
  $region41: #{tpu_custom_call.1} parent=0
    _
  %s5 = ssub.s32 1, %s3
  %s6 = scalar_select 0, %s5, %s3
  loop: start=0, step=1, limit=4
  $region2: #{tpu_custom_call.1} parent=0 // loop_pre_header
    _
  $region3: #{tpu_custom_call.1} parent=0 // loop_header
    %s8 = sphi 0, %s12
    %p9 = scmp.ge.s32.totalorder %s8, 4
    %s18 = sphi 0, %s20
    %s21 = sphi 0, %s18
    %s22 = sphi 0, %s21
    %s38 = sphi 0, %s22
    %s42 = sphi 0, %s42
    %s44 = sphi 0, %s42
    %s45 = sphi 0, %s44
    %s59 = sphi 0, %s45
    %s65 = sphi 0, %s67
    %s68 = sphi 0, %s65
    %s69 = sphi 0, %s68
    %s85 = sphi 0, %s69
  $region4: #{tpu_custom_call.1} parent=0 // loop_header_branch
    %11 = sbr.rel (%p9) target = $region8
  $region5: #{tpu_custom_call.1} parent=0 // loop_body
    %s13 = ssub.s32 %s8, 1
    %s14 = ssub.s32 %s8, 2
    %s15 = sadd.s32 %s8, 1
    %s16 = ssub.s32 %s8, %s15
    %p17 = scmp.eq.s32.totalorder %s16, 0
    %s19 = sadd.s32 %s18, 1
    %s20 = scalar_select %p17, %s18, %s19
    %p23 = pneg %p17
    %p24 = scmp.eq.s32.totalorder %s8, 1
    %p25 = por %p23, %p24
    %p26 = scmp.ne.s32.totalorder %s18, %s21
    %p27 = scmp.eq.s32.totalorder %s8, 0
    %p28 = por %p26, %p27
    %p29 = scmp.ne.s32.totalorder %s18, %s21
    %p30 = scmp.eq.s32.totalorder %s13, 1
    %p31 = por %p29, %p30
    %p32 = scmp.ne.s32.totalorder %s21, %s22
    %p33 = scmp.eq.s32.totalorder %s13, 0
    %p34 = por %p32, %p33
    %p35 = scmp.ne.s32.totalorder %s21, %s22
    %p36 = scmp.eq.s32.totalorder %s14, 1
    %p37 = por %p35, %p36
    %p39 = scmp.ne.s32.totalorder %s22, %s38
    %p40 = scmp.eq.s32.totalorder %s14, 0
    %p41 = por %p39, %p40
    %s43 = sadd.s32 %s42, 1
    %p46 = scmp.eq.s32.totalorder %s8, 1
    %p47 = scmp.ne.s32.totalorder %s42, %s44
    %p48 = scmp.eq.s32.totalorder %s8, 0
    %p49 = por %p47, %p48
    %p50 = scmp.ne.s32.totalorder %s42, %s44
    %p51 = scmp.eq.s32.totalorder %s13, 1
    %p52 = por %p50, %p51
    %p53 = scmp.ne.s32.totalorder %s44, %s45
    %p54 = scmp.eq.s32.totalorder %s13, 0
    %p55 = por %p53, %p54
    %p56 = scmp.ne.s32.totalorder %s44, %s45
    %p57 = scmp.eq.s32.totalorder %s14, 1
    %p58 = por %p56, %p57
    %p60 = scmp.ne.s32.totalorder %s45, %s59
    %p61 = scmp.eq.s32.totalorder %s14, 0
    %p62 = por %p60, %p61
    %s63 = ssub.s32 %s8, %s15
    %p64 = scmp.eq.s32.totalorder %s63, 0
    %s66 = sadd.s32 %s65, 1
    %s67 = scalar_select %p64, %s65, %s66
    %p70 = pneg %p64
    %p71 = scmp.eq.s32.totalorder %s8, 1
    %p72 = por %p70, %p71
    %p73 = scmp.ne.s32.totalorder %s65, %s68
    %p74 = scmp.eq.s32.totalorder %s8, 0
    %p75 = por %p73, %p74
    %p76 = scmp.ne.s32.totalorder %s65, %s68
    %p77 = scmp.eq.s32.totalorder %s13, 1
    %p78 = por %p76, %p77
    %p79 = scmp.ne.s32.totalorder %s68, %s69
    %p80 = scmp.eq.s32.totalorder %s13, 0
    %p81 = por %p79, %p80
    %p82 = scmp.ne.s32.totalorder %s68, %s69
    %p83 = scmp.eq.s32.totalorder %s14, 1
    %p84 = por %p82, %p83
    %p86 = scmp.ne.s32.totalorder %s69, %s85
    %p87 = scmp.eq.s32.totalorder %s14, 0
    %p88 = por %p86, %p87
    %p89 = scmp.le.s32.totalorder 1, %s8
    %p90 = scmp.lt.s32.totalorder %s8, 3
    %p91 = pnand %p89, %p90
    %p92 = pneg %p91
    // Predicated region
    $region9: #{tpu_custom_call.1} parent=5 // pred_check
      _
    $region10: #{tpu_custom_call.1} parent=5 // pred_check_branch
      %94 = sbr.rel (%p91) target = $region12
    $region11: #{tpu_custom_call.1} parent=5 // pred_region
      %s95 = ssub.s32 %s8, 1
      // Predicated region
      $region13: #{tpu_custom_call.1} parent=11 // pred_check
        %p96 = pneg %p55
      $region14: #{tpu_custom_call.1} parent=11 // pred_check_branch
        %98 = sbr.rel (%p96) target = $region16
      $region15: #{tpu_custom_call.1} parent=11 // pred_region
        _
      $region16: #{tpu_custom_call.1} parent=11 // pred_fallthru
        _
    $region12: #{tpu_custom_call.1} parent=5 // pred_fallthru
      _
    %p99 = scmp.lt.s32.totalorder %s8, 2
    // Predicated region
    $region17: #{tpu_custom_call.1} parent=5 // pred_check
      %p100 = pneg %p99
    $region18: #{tpu_custom_call.1} parent=5 // pred_check_branch
      %102 = sbr.rel (%p100) target = $region20
    $region19: #{tpu_custom_call.1} parent=5 // pred_region
      // Predicated region
      $region21: #{tpu_custom_call.1} parent=19 // pred_check
        %p103 = pneg %p28
      $region22: #{tpu_custom_call.1} parent=19 // pred_check_branch
        %105 = sbr.rel (%p103) target = $region24
      $region23: #{tpu_custom_call.1} parent=19 // pred_region
        %p106 = scmp.lt.s32.totalorder %s8, 1
        %s107 = scalar_select %p106, %s8, 1
        %s108 = smul.addr %s107, 2
        %s109 = smul.addr %s108, 8
        %s110 = scalar_lea.vmem %s0, %s109
      $region24: #{tpu_custom_call.1} parent=19 // pred_fallthru
        _
    $region20: #{tpu_custom_call.1} parent=5 // pred_fallthru
      _
    %p111 = scmp.le.s32.totalorder 1, %s8
    %p112 = scmp.lt.s32.totalorder %s8, 3
    %p113 = pnand %p111, %p112
    %p114 = pneg %p113
    // Predicated region
    $region25: #{tpu_custom_call.1} parent=5 // pred_check
      _
    $region26: #{tpu_custom_call.1} parent=5 // pred_check_branch
      %116 = sbr.rel (%p113) target = $region28
    $region27: #{tpu_custom_call.1} parent=5 // pred_region
      %s117 = ssub.s32 %s8, 1
      %p118 = scmp.lt.s32.totalorder %s13, 1
      %s119 = scalar_select %p118, %s13, 1
      %s120 = smul.addr %s119, 2
      %s121 = smul.addr %s120, 8
      %s122 = scalar_lea.vmem %s0, %s121
      %p123 = pneg %p34
      %p124 = pneg %p31
      %p125 = pneg %p55
      %p126 = pneg %p52
      %p127 = pneg %p81
      %p128 = pneg %p78
      %p129 = scmp.lt.s32.totalorder %s13, 1
      %s130 = scalar_select %p129, %s13, 1
      %s131 = smul.addr %s130, 2
      %s132 = smul.addr %s131, 8
      %s133 = scalar_lea.vmem %s2, %s132
      %p134 = scmp.lt.s32.totalorder %s13, 1
      %s135 = scalar_select %p134, %s13, 1
      %s136 = smul.addr %s135, 2
      %s137 = smul.addr %s136, 8
      %s138 = scalar_lea.vmem %s0, %s137
      %p139 = scmp.lt.s32.totalorder %s13, 1
      %s140 = scalar_select %p139, %s13, 1
      %s141 = smul.addr %s140, 2
      %s142 = smul.addr %s141, 8
      %s143 = scalar_lea.vmem %s2, %s142
      %v144 = vld [vmem:[%s1] sm:$0xff]
      %v145 = vld [vmem:[%s1 + $0x8] sm:$0xff]
      %v146 = vld [vmem:[%s138] sm:$0xff]
      %v147 = vld [vmem:[%s138 + $0x8] sm:$0xff]
      %vm148 = vcmask 130048
      %v150 = vsel %vm148, %v144, 0
      %v153 = vsel %vm148, %v145, 0
      %155 = vmatprep.subr.mxu0 0.0
      %156 = vmatpush1.msra.mxu0 %v146
      %157 = vmatprep.subr.mxu0 0.0
      %158 = vmatpush1.msra.mxu0 %v147
      %159 = vmatprep.subr.mxu0 0.0
      %160 = vmatpush1.msra.mxu0 0.0
      %161 = vmatprep.subr.mxu0 0.0
      %162 = vmatpush1.msra.mxu0 0.0
      %163 = vmatprep.subr.mxu0 0.0
      %164 = vmatpush1.msra.mxu0 0.0
      %165 = vmatprep.subr.mxu0 0.0
      %166 = vmatpush1.msra.mxu0 0.0
      %167 = vmatprep.subr.mxu0 0.0
      %168 = vmatpush1.msra.mxu0 0.0
      %169 = vmatprep.subr.mxu0 0.0
      %170 = vmatpush1.msra.mxu0 0.0
      %171 = vmatprep.subr.mxu0 0.0
      %172 = vmatpush1.msra.mxu0 0.0
      %173 = vmatprep.subr.mxu0 0.0
      %174 = vmatpush1.msra.mxu0 0.0
      %175 = vmatprep.subr.mxu0 0.0
      %176 = vmatpush1.msra.mxu0 0.0
      %177 = vmatprep.subr.mxu0 0.0
      %178 = vmatpush1.msra.mxu0 0.0
      %179 = vmatprep.subr.mxu0 0.0
      %180 = vmatpush1.msra.mxu0 0.0
      %181 = vmatprep.subr.mxu0 0.0
      %182 = vmatpush1.msra.mxu0 0.0
      %183 = vmatprep.subr.mxu0 0.0
      %184 = vmatpush1.msra.mxu0 0.0
      %185 = vmatprep.subr.mxu0 0.0
      %186 = vmatpush1.msra.mxu0 0.0
      %187 = vmatprep.subr.mxu0 0.0
      %188 = vmatpush1.msra.mxu0 0.0
      %189 = vmatprep.subr.mxu0 0.0
      %190 = vmatpush1.msra.mxu0 0.0
      %191 = vmatprep.subr.mxu0 0.0
      %192 = vmatpush1.msra.mxu0 0.0
      %193 = vmatprep.subr.mxu0 0.0
      %194 = vmatpush1.msra.mxu0 0.0
      %195 = vmatprep.subr.mxu0 0.0
      %196 = vmatpush1.msra.mxu0 0.0
      %197 = vmatprep.subr.mxu0 0.0
      %198 = vmatpush1.msra.mxu0 0.0
      %199 = vmatprep.subr.mxu0 0.0
      %200 = vmatpush1.msra.mxu0 0.0
      %201 = vmatprep.subr.mxu0 0.0
      %202 = vmatpush1.msra.mxu0 0.0
      %203 = vmatprep.subr.mxu0 0.0
      %204 = vmatpush1.msra.mxu0 0.0
      %205 = vmatprep.subr.mxu0 0.0
      %206 = vmatpush1.msra.mxu0 0.0
      %207 = vmatprep.subr.mxu0 0.0
      %208 = vmatpush1.msra.mxu0 0.0
      %209 = vmatprep.subr.mxu0 0.0
      %210 = vmatpush1.msra.mxu0 0.0
      %211 = vmatprep.subr.mxu0 0.0
      %212 = vmatpush1.msra.mxu0 0.0
      %213 = vmatprep.subr.mxu0 0.0
      %214 = vmatpush1.msra.mxu0 0.0
      %215 = vmatprep.subr.mxu0 0.0
      %216 = vmatpush1.msra.mxu0 0.0
      %217 = vmatprep.subr.mxu0 0.0
      %218 = vmatpush1.msra.mxu0 0.0
      %219 = vmatprep.mubr.f32.mxu0 0.0
      %220 = vmatmul.mubr.f32.gmra.mrb[0].mxu0 %v150
      %v221 = vpop.f32.mrb[0].mxu0
      %v222 = vadd.f32 0.0, %v221
      %v223 = vpop.f32.mrb[0].mxu0
      %224 = vmatprep.mubr.f32.mxu0 0.0
      %225 = vmatmul.mubr.f32.gmra.mrb[0].mxu0 %v153
      %v226 = vpop.f32.mrb[0].mxu0
      %v227 = vadd.f32 0.0, %v226
      %v228 = vpop.f32.mrb[0].mxu0
      %229 = vdwg.mxu0
      %vm230 = vcmask 31744
      %231 = vst.msk [vmem:[%s143] sm:$0xff] %vm230, %v146
      %232 = vst.msk [vmem:[%s143 + $0x8] sm:$0xff] %vm230, %v147
      %235 = vrot.lane.b32.xlu0 %v222, 4
      %v236 = vpop.permute.xlu0 %235
      %237 = vrot.lane.b32.xlu0 %v227, 4
      %v238 = vpop.permute.xlu0 %237
      %vm241 = vcmask 64544
      %242 = vst.msk [vmem:[%s143] sm:$0xff] %vm241, %v236
      %243 = vst.msk [vmem:[%s143 + $0x8] sm:$0xff] %vm241, %v238
      %p244 = scmp.lt.s32.totalorder %s13, 1
      %s245 = scalar_select %p244, %s13, 1
      %s246 = smul.addr %s245, 2
      %s247 = smul.addr %s246, 8
      %s248 = scalar_lea.vmem %s2, %s247
      // Predicated region
      $region29: #{tpu_custom_call.1} parent=27 // pred_check
        %p249 = pneg %p78
      $region30: #{tpu_custom_call.1} parent=27 // pred_check_branch
        %251 = sbr.rel (%p249) target = $region32
      $region31: #{tpu_custom_call.1} parent=27 // pred_region
        _
      $region32: #{tpu_custom_call.1} parent=27 // pred_fallthru
        _
    $region28: #{tpu_custom_call.1} parent=5 // pred_fallthru
      _
    %p252 = scmp.le.s32.totalorder 2, %s8
    // Predicated region
    $region33: #{tpu_custom_call.1} parent=5 // pred_check
      %p253 = pneg %p252
    $region34: #{tpu_custom_call.1} parent=5 // pred_check_branch
      %255 = sbr.rel (%p253) target = $region36
    $region35: #{tpu_custom_call.1} parent=5 // pred_region
      %s256 = ssub.s32 %s8, 2
      // Predicated region
      $region37: #{tpu_custom_call.1} parent=35 // pred_check
        %p257 = pneg %p84
      $region38: #{tpu_custom_call.1} parent=35 // pred_check_branch
        %259 = sbr.rel (%p257) target = $region40
      $region39: #{tpu_custom_call.1} parent=35 // pred_region
        %p260 = scmp.lt.s32.totalorder %s14, 1
        %s261 = scalar_select %p260, %s14, 1
        %s262 = smul.addr %s261, 2
        %s263 = smul.addr %s262, 8
        %s264 = scalar_lea.vmem %s2, %s263
      $region40: #{tpu_custom_call.1} parent=35 // pred_fallthru
        _
    $region36: #{tpu_custom_call.1} parent=5 // pred_fallthru
      _
  $region6: #{tpu_custom_call.1} parent=0 // loop_footer
    %s12 = sadd.s32 1, %s8
  $region7: #{tpu_custom_call.1} parent=0 // loop_footer_branch
    %7 = sbr.rel target = $region3
  $region8: #{tpu_custom_call.1} parent=0 // loop_exit
    _

</llo_original>
